<compile_context>
chip_gen: v5e
topology: v5e:2x2
jax: 0.10.0
libtpu: 0.0.40
codegen_flags: <defaults>
</compile_context>

<pallas_src>
import jax
import jax.numpy as jnp
from jax.experimental import pallas as pl
from jax.experimental.pallas import tpu as pltpu

VOCAB = 50
EMBED = 32
NUM_CLASSES = 5

VPAD = 128        # vocab padded for a lane-dense one-hot gather matmul
EPAD = 128        # Q / K / class slabs each padded to one 128-lane tile
NC_PAD = 128      # lane-dense padded class-output width (== third slab width)


def lite_attention_kernel(ids_ref, w_ref, b_ref, bfc_ref, out_ref):
    # ids_ref : (Bt, L)  int32        token ids for this batch block
    # w_ref   : (VPAD, 3*EPAD) bf16   emb @ [Wq^T/sqrt(E) | Wk^T | Wv^T Wfc^T], padded
    # b_ref   : (1, 3*EPAD) f32       [bq/sqrt(E) | bk | bv Wfc^T], padded
    # bfc_ref : (1, NC_PAD) f32       FC bias, padded
    # out_ref : (Bt, NC_PAD) f32
    bt, seq = ids_ref.shape

    # --- one-hot gather fused with Q / K / class projections (one MXU pass) --
    ids = ids_ref[...]
    lane = jax.lax.broadcasted_iota(jnp.int32, (bt, seq, VPAD), 2)
    onehot = jnp.where(lane == ids[:, :, None], 1.0, 0.0).astype(jnp.bfloat16)
    qkc = jnp.dot(onehot.reshape(bt * seq, VPAD), w_ref[...],
                  preferred_element_type=jnp.float32)              # (Bt*L, 3*EPAD)
    qkc = (qkc + b_ref[...]).reshape(bt, seq, 3 * EPAD)

    q = qkc[:, :, 0:EPAD].astype(jnp.bfloat16)       # 1/sqrt(E) pre-folded into Wq/bq
    k = qkc[:, :, EPAD:2 * EPAD].astype(jnp.bfloat16)
    c_tok = qkc[:, :, 2 * EPAD:3 * EPAD]             # per-token class contributions

    # --- softmax(Q K^T) (padded lanes are zero and contribute nothing) -------
    s = jnp.einsum('bqe,bke->bqk', q, k,
                   preferred_element_type=jnp.float32)             # (Bt, L, L)
    p = jnp.exp(s - jnp.max(s, axis=-1, keepdims=True))
    attn = p * pl.reciprocal(jnp.sum(p, axis=-1, keepdims=True), approx=True)

    # --- mean pool commuted ahead of the value/FC contraction ----------------
    pooled_attn = jnp.sum(attn, axis=1) * (1.0 / seq)              # (Bt, L)
    out = jnp.sum(pooled_attn[:, :, None] * c_tok, axis=1) + bfc_ref[...]
    out_ref[...] = out.astype(out_ref.dtype)


def init_params(key):
    ks = jax.random.split(key, 9)
    emb = jax.random.normal(ks[0], (VOCAB, EMBED), jnp.float32) * 0.1
    wq = jax.random.normal(ks[1], (EMBED, EMBED), jnp.float32) * 0.1
    bq = jax.random.normal(ks[2], (EMBED,), jnp.float32) * 0.1
    wk = jax.random.normal(ks[3], (EMBED, EMBED), jnp.float32) * 0.1
    bk = jax.random.normal(ks[4], (EMBED,), jnp.float32) * 0.1
    wv = jax.random.normal(ks[5], (EMBED, EMBED), jnp.float32) * 0.1
    bv = jax.random.normal(ks[6], (EMBED,), jnp.float32) * 0.1
    wfc = jax.random.normal(ks[7], (NUM_CLASSES, EMBED), jnp.float32) * 0.1
    bfc = jax.random.normal(ks[8], (NUM_CLASSES,), jnp.float32) * 0.1
    return emb, wq, bq, wk, bk, wv, bv, wfc, bfc


def prepare_params(params):
    """One-time offline weight re-layout + algebraic folds (hoisted)."""
    emb, wq, bq, wk, bk, wv, bv, wfc, bfc = params
    scale = 1.0 / (EMBED ** 0.5)

    emb_pad = jnp.zeros((VPAD, EMBED), jnp.float32).at[:VOCAB].set(emb)

    # Per-token linear maps: score scale folded into Wq/bq, FC folded into V.
    wq_s = wq.T * scale                       # (E, E)
    bq_s = bq * scale
    wk_t = wk.T                               # (E, E)
    wvc = wv.T @ wfc.T                        # (E, C)   V @ Wfc^T token map
    bvc = bv @ wfc.T                          # (C,)

    w = jnp.zeros((EMBED, 3 * EPAD), jnp.float32)
    b = jnp.zeros((1, 3 * EPAD), jnp.float32)
    w = w.at[:, 0:EMBED].set(wq_s)
    b = b.at[0, 0:EMBED].set(bq_s)
    w = w.at[:, EPAD:EPAD + EMBED].set(wk_t)
    b = b.at[0, EPAD:EPAD + EMBED].set(bk)
    w = w.at[:, 2 * EPAD:2 * EPAD + NUM_CLASSES].set(wvc)
    b = b.at[0, 2 * EPAD:2 * EPAD + NUM_CLASSES].set(bvc)

    # Fold the embedding gather into the projections (gather is linear).
    emb_qkc = (emb_pad @ w).astype(jnp.bfloat16)              # (VPAD, 3*EPAD)
    bfc_pad = jnp.zeros((1, NC_PAD), jnp.float32).at[0, :NUM_CLASSES].set(bfc)
    return emb_qkc, b, bfc_pad


def _pick_batch_tile(batch):
    # Largest multiple-of-8 tile (capped at 256) dividing the batch; when the
    # batch is big enough, keep >=2 grid steps so the "parallel" axis can
    # shard across v7x's two TensorCores. Small/odd batches collapse to one
    # full-batch block (block == full dims, always valid).
    best = None
    for bt in (256, 128, 64, 32, 16, 8):
        if batch % bt == 0:
            best = bt
            break
    if best is None:
        return batch
    if batch // best == 1 and batch >= 16:
        best //= 2
    return best


def lite_attention_forward(input_ids, prepared):
    emb_qkc, b_pad, bfc_pad = prepared
    batch, seq = input_ids.shape
    bt = _pick_batch_tile(batch)
    nblocks = batch // bt

    out_padded = pl.pallas_call(
        lite_attention_kernel,
        out_shape=jax.ShapeDtypeStruct((batch, NC_PAD), jnp.float32),
        grid_spec=pltpu.PrefetchScalarGridSpec(
            num_scalar_prefetch=0,
            grid=(nblocks,),
            in_specs=[
                pl.BlockSpec((bt, seq), lambda i: (i, 0)),          # lane-dense ids
                pl.BlockSpec((VPAD, 3 * EPAD), lambda i: (0, 0)),   # fused weights
                pl.BlockSpec((1, 3 * EPAD), lambda i: (0, 0)),      # fused biases
                pl.BlockSpec((1, NC_PAD), lambda i: (0, 0)),        # FC bias
            ],
            out_specs=pl.BlockSpec((bt, NC_PAD), lambda i: (i, 0)),
        ),
        compiler_params=pltpu.CompilerParams(
            dimension_semantics=("parallel",)),
    )(input_ids.astype(jnp.int32), emb_qkc, b_pad, bfc_pad)

    return out_padded[:, :NUM_CLASSES]                # (B, num_classes)


def reference_forward(input_ids, params):
    emb, wq, bq, wk, bk, wv, bv, wfc, bfc = params
    hi = jax.lax.Precision.HIGHEST
    x = emb[input_ids]                                              # (B, L, E)
    q = jnp.einsum('ble,oe->blo', x, wq, precision=hi) + bq
    k = jnp.einsum('ble,oe->blo', x, wk, precision=hi) + bk
    v = jnp.einsum('ble,oe->blo', x, wv, precision=hi) + bv
    s = jnp.einsum('bqe,bke->bqk', q, k, precision=hi) / (x.shape[-1] ** 0.5)
    attn = jax.nn.softmax(s, axis=-1)
    ctx = jnp.einsum('bqk,bke->bqe', attn, v, precision=hi)
    pooled = ctx.mean(axis=1)
    return jnp.einsum('be,oe->bo', pooled, wfc, precision=hi) + bfc


if __name__ == "__main__":
    key = jax.random.PRNGKey(0)
    pkey, dkey = jax.random.split(key)
    params = init_params(pkey)
    prepared = prepare_params(params)       # one-time algebraic folds (hoisted)

    B, L = 2, 16
    input_ids = jax.random.randint(dkey, (B, L), 0, VOCAB, dtype=jnp.int32)

    out = lite_attention_forward(input_ids, prepared)
    out = jax.block_until_ready(out)

    ref = reference_forward(input_ids, params)
    assert out.shape == (B, NUM_CLASSES)
    assert jnp.allclose(out, ref, atol=2e-3, rtol=2e-3), (out, ref)
    print("KERNEL_OK")
</pallas_src>

<mosaic_0001>
module attributes {stable_mosaic.version = 11 : i64} {
  func.func @lite_attention_kernel(%arg0: i32, %arg1: memref<2x16xi32, #tpu.memory_space<vmem>>, %arg2: memref<128x384xbf16, #tpu.memory_space<vmem>>, %arg3: memref<1x384xf32, #tpu.memory_space<vmem>>, %arg4: memref<1x128xf32, #tpu.memory_space<vmem>>, %arg5: memref<2x128xf32, #tpu.memory_space<vmem>>) attributes {dimension_semantics = [#tpu.dimension_semantics<parallel>], iteration_bounds = array<i64: 1>, scalar_prefetch = 0 : i64, scratch_operands = 0 : i64, tpu.core_type = #tpu.core_type<tc>, window_params = [{transform_indices = @transform_0, window_bounds = array<i64: 2, 16>}, {pipeline_mode = #tpu.pipeline_mode<synchronous>, transform_indices = @transform_1, window_bounds = array<i64: 128, 384>}, {pipeline_mode = #tpu.pipeline_mode<synchronous>, transform_indices = @transform_2, window_bounds = array<i64: 1, 384>}, {pipeline_mode = #tpu.pipeline_mode<synchronous>, transform_indices = @transform_3, window_bounds = array<i64: 1, 128>}, {transform_indices = @transform_4, window_bounds = array<i64: 2, 128>}]} {
    %c0 = arith.constant 0 : index
    %c0_0 = arith.constant 0 : index
    %0 = vector.load %arg1[%c0, %c0_0] : memref<2x16xi32, #tpu.memory_space<vmem>>, vector<2x16xi32>
    %1 = tpu.iota {dimensions = array<i32: 2>} : vector<2x16x128xi32>
    %2 = vector.shape_cast %0 : vector<2x16xi32> to vector<2x16x1xi32>
    %3 = vector.broadcast %2 : vector<2x16x1xi32> to vector<2x16x128xi32>
    %4 = arith.cmpi eq, %1, %3 : vector<2x16x128xi32>
    %cst = arith.constant 1.000000e+00 : f32
    %cst_1 = arith.constant 0.000000e+00 : f32
    %5 = vector.broadcast %cst : f32 to vector<2x16x128xf32>
    %6 = vector.broadcast %cst_1 : f32 to vector<2x16x128xf32>
    %7 = arith.select %4, %5, %6 : vector<2x16x128xi1>, vector<2x16x128xf32>
    %8 = arith.truncf %7 : vector<2x16x128xf32> to vector<2x16x128xbf16>
    %9 = vector.shape_cast %8 : vector<2x16x128xbf16> to vector<32x128xbf16>
    %c0_2 = arith.constant 0 : index
    %c0_3 = arith.constant 0 : index
    %10 = vector.load %arg2[%c0_2, %c0_3] : memref<128x384xbf16, #tpu.memory_space<vmem>>, vector<128x384xbf16>
    %cst_4 = arith.constant dense<0.000000e+00> : vector<32x384xf32>
    %11 = tpu.matmul %9, %10, %cst_4 {dimension_numbers = #tpu.dot_dimension_numbers<[1], [0], [0], [1], [0, 0, 1, 1], [], []>} : vector<32x128xbf16>, vector<128x384xbf16>, vector<32x384xf32> -> vector<32x384xf32>
    %c0_5 = arith.constant 0 : index
    %c0_6 = arith.constant 0 : index
    %12 = vector.load %arg3[%c0_5, %c0_6] : memref<1x384xf32, #tpu.memory_space<vmem>>, vector<1x384xf32>
    %13 = vector.broadcast %12 : vector<1x384xf32> to vector<32x384xf32>
    %14 = arith.addf %11, %13 : vector<32x384xf32>
    %15 = vector.shape_cast %14 : vector<32x384xf32> to vector<2x16x384xf32>
    %16 = vector.extract_strided_slice %15 {offsets = [0, 0, 0], sizes = [2, 16, 128], strides = [1, 1, 1]} : vector<2x16x384xf32> to vector<2x16x128xf32>
    %17 = arith.truncf %16 : vector<2x16x128xf32> to vector<2x16x128xbf16>
    %18 = vector.extract_strided_slice %15 {offsets = [0, 0, 128], sizes = [2, 16, 128], strides = [1, 1, 1]} : vector<2x16x384xf32> to vector<2x16x128xf32>
    %19 = arith.truncf %18 : vector<2x16x128xf32> to vector<2x16x128xbf16>
    %20 = vector.extract_strided_slice %15 {offsets = [0, 0, 256], sizes = [2, 16, 128], strides = [1, 1, 1]} : vector<2x16x384xf32> to vector<2x16x128xf32>
    "tpu.trace_start"() <{level = 10 : i32, message = "bqe,bke->bqk"}> : () -> ()
    %cst_7 = arith.constant dense<0.000000e+00> : vector<2x16x16xf32>
    %21 = tpu.matmul %17, %19, %cst_7 {dimension_numbers = #tpu.dot_dimension_numbers<[2], [2], [1], [1], [0, 0, 0, 1, 1, 1], [0], [0]>} : vector<2x16x128xbf16>, vector<2x16x128xbf16>, vector<2x16x16xf32> -> vector<2x16x16xf32>
    "tpu.trace_stop"() : () -> ()
    %cst_8 = arith.constant dense<0xFF800000> : vector<2x16xf32>
    %22 = vector.multi_reduction <maximumf>, %21, %cst_8 [2] : vector<2x16x16xf32> to vector<2x16xf32>
    %23 = vector.shape_cast %22 : vector<2x16xf32> to vector<2x16x1xf32>
    %24 = vector.broadcast %23 : vector<2x16x1xf32> to vector<2x16x16xf32>
    %25 = arith.subf %21, %24 : vector<2x16x16xf32>
    %26 = math.exp %25 : vector<2x16x16xf32>
    %cst_9 = arith.constant dense<0.000000e+00> : vector<2x16xf32>
    %27 = vector.multi_reduction <add>, %26, %cst_9 [2] : vector<2x16x16xf32> to vector<2x16xf32>
    %28 = vector.shape_cast %27 : vector<2x16xf32> to vector<2x16x1xf32>
    %29 = tpu.reciprocal %28 {approx = true} : vector<2x16x1xf32> -> vector<2x16x1xf32>
    %30 = vector.broadcast %29 : vector<2x16x1xf32> to vector<2x16x16xf32>
    %31 = arith.mulf %26, %30 : vector<2x16x16xf32>
    %cst_10 = arith.constant dense<0.000000e+00> : vector<2x16xf32>
    %32 = vector.multi_reduction <add>, %31, %cst_10 [1] : vector<2x16x16xf32> to vector<2x16xf32>
    %cst_11 = arith.constant 6.250000e-02 : f32
    %33 = vector.broadcast %cst_11 : f32 to vector<2x16xf32>
    %34 = arith.mulf %32, %33 : vector<2x16xf32>
    %35 = vector.shape_cast %34 : vector<2x16xf32> to vector<2x16x1xf32>
    %36 = vector.broadcast %35 : vector<2x16x1xf32> to vector<2x16x128xf32>
    %37 = arith.mulf %36, %20 : vector<2x16x128xf32>
    %cst_12 = arith.constant dense<0.000000e+00> : vector<2x128xf32>
    %38 = vector.multi_reduction <add>, %37, %cst_12 [1] : vector<2x16x128xf32> to vector<2x128xf32>
    %c0_13 = arith.constant 0 : index
    %c0_14 = arith.constant 0 : index
    %39 = vector.load %arg4[%c0_13, %c0_14] : memref<1x128xf32, #tpu.memory_space<vmem>>, vector<1x128xf32>
    %40 = vector.broadcast %39 : vector<1x128xf32> to vector<2x128xf32>
    %41 = arith.addf %38, %40 : vector<2x128xf32>
    %c0_15 = arith.constant 0 : index
    %c0_16 = arith.constant 0 : index
    %42 = vector.load %arg5[%c0_15, %c0_16] : memref<2x128xf32, #tpu.memory_space<vmem>>, vector<2x128xf32>
    tpu.vector_store %arg5[%c0_15, %c0_16], %41 {strides = array<i32>} : memref<2x128xf32, #tpu.memory_space<vmem>>, vector<2x128xf32>,
    return
  }
  func.func @transform_0(%arg0: i32) -> (i32, i32) {
    %c0_i32 = arith.constant 0 : i32
    %c0_i32_0 = arith.constant 0 : i32
    return %arg0, %c0_i32 : i32, i32
  }
  func.func @transform_1(%arg0: i32) -> (i32, i32) {
    %c0_i32 = arith.constant 0 : i32
    %c0_i32_0 = arith.constant 0 : i32
    %c0_i32_1 = arith.constant 0 : i32
    return %c0_i32, %c0_i32_0 : i32, i32
  }
  func.func @transform_2(%arg0: i32) -> (i32, i32) {
    %c0_i32 = arith.constant 0 : i32
    %c0_i32_0 = arith.constant 0 : i32
    %c0_i32_1 = arith.constant 0 : i32
    return %c0_i32, %c0_i32_0 : i32, i32
  }
  func.func @transform_3(%arg0: i32) -> (i32, i32) {
    %c0_i32 = arith.constant 0 : i32
    %c0_i32_0 = arith.constant 0 : i32
    %c0_i32_1 = arith.constant 0 : i32
    return %c0_i32, %c0_i32_0 : i32, i32
  }
  func.func @transform_4(%arg0: i32) -> (i32, i32) {
    %c0_i32 = arith.constant 0 : i32
    %c0_i32_0 = arith.constant 0 : i32
    return %arg0, %c0_i32 : i32, i32
  }
}

</mosaic_0001>

<llo_original>
// kernel: tpu_custom_call.1
$region0: #{tpu_custom_call.1}
  #allocation0 [shape = 'u32[]', space=smem, size = 0x4, offset = 0x4, fixed_abs, tag = 'smem constant byte address 0x4 - core index']
  #allocation1 [shape = 'u32[72,128]{1,0:T(1,128)}', space=vmem, size = 0x9000, scoped, tag = 'internal scratch']
  %s0 = inlined_call_operand.hbm [shape: s32[2,16], index: 0, kind: input, shape index: {}]
  %s1 = inlined_call_operand.hbm [shape: bf16[128,384], index: 1, kind: input, shape index: {}]
  %s2 = inlined_call_operand.hbm [shape: f32[1,384], index: 2, kind: input, shape index: {}]
  %s3 = inlined_call_operand.vmem [shape: f32[1,128], index: 3, kind: input, shape index: {}]
  %s4 = inlined_call_operand.hbm [shape: f32[2,128], index: 4, kind: output, shape index: {}]
  %s5 = sld [smem:[#allocation0]]
  $region38: #{tpu_custom_call.1} parent=0
    _
  %s7 = ssub.s32 1, %s5
  %s8 = scalar_select 0, %s7, %s5
  $region1: #{tpu_custom_call.1} parent=0
    #allocation2 [shape = 'u8[1024]{0}', space=vmem, size = 0x400, scoped, tag = 'input window, operand 0, single buffered']
    #allocation3 [shape = 's32[1]{0}', space=sflag, size = 0x4, scoped, tag = 'scoped memory for tpu_custom_call.1']
    #allocation4 [shape = 's32[1]{0}', space=sflag, size = 0x4, scoped, tag = 'scoped memory for tpu_custom_call.1']
    #allocation5 [shape = 'u8[98304]{0}', space=vmem, size = 0x18000, scoped, tag = 'input window, operand 1, single buffered']
    #allocation6 [shape = 's32[1]{0}', space=sflag, size = 0x4, scoped, tag = 'scoped memory for tpu_custom_call.1']
    #allocation7 [shape = 'u8[1536]{0}', space=vmem, size = 0x800, scoped, tag = 'input window, operand 2, single buffered']
    #allocation8 [shape = 'u8[1024]{0}', space=vmem, size = 0x400, scoped, tag = 'output window, operand 0, single buffered']
    %9 = vsyncpa [#allocation3], 0
    %10 = vsyncpa [#allocation6], 0
    %11 = vsyncpa [#allocation4], 0
    // Predicated region
    $region2: #{tpu_custom_call.1} parent=1 // pred_check
      _
    $region3: #{tpu_custom_call.1} parent=1 // pred_check_branch
      %13 = sbr.rel (0) target = $region5
    $region4: #{tpu_custom_call.1} parent=1 // pred_region
      %15 = vsyncadd [#allocation3], 0
      %s17 = sshll.u32 %s0, 4
      %s18 = int_to_ptr.hbm [resolvable:$true] %s17
      %s19 = sshll.u32 [#allocation2], 4
      %s20 = int_to_ptr.vmem [resolvable:$true] %s19
      %22 = dma.hbm_to_vmem [thread:$0]  %s18, 32, %s20, [#allocation3]
    $region5: #{tpu_custom_call.1} parent=1 // pred_fallthru
      _
    // Predicated region
    $region6: #{tpu_custom_call.1} parent=1 // pred_check
      _
    $region7: #{tpu_custom_call.1} parent=1 // pred_check_branch
      %24 = sbr.rel (0) target = $region9
    $region8: #{tpu_custom_call.1} parent=1 // pred_region
      %26 = vsyncadd [#allocation6], 0
      %s27 = sshll.u32 %s1, 4
      %s28 = int_to_ptr.hbm [resolvable:$true] %s27
      %s29 = sshll.u32 [#allocation5], 4
      %s30 = int_to_ptr.vmem [resolvable:$true] %s29
      %35 = dma.hbm_to_vmem [thread:$0]  %s28, 3072, %s30, [#allocation6], 192, 192, 12
    $region9: #{tpu_custom_call.1} parent=1 // pred_fallthru
      _
    // Predicated region
    $region10: #{tpu_custom_call.1} parent=1 // pred_check
      _
    $region11: #{tpu_custom_call.1} parent=1 // pred_check_branch
      %37 = sbr.rel (0) target = $region13
    $region12: #{tpu_custom_call.1} parent=1 // pred_region
      %39 = vsyncadd [#allocation6], 0
      %s41 = sshll.u32 %s2, 4
      %s42 = int_to_ptr.hbm [resolvable:$true] %s41
      %s43 = sshll.u32 [#allocation7], 4
      %s44 = int_to_ptr.vmem [resolvable:$true] %s43
      %46 = dma.hbm_to_vmem [thread:$0]  %s42, 48, %s44, [#allocation6]
    $region13: #{tpu_custom_call.1} parent=1 // pred_fallthru
      _
    // Predicated region
    $region14: #{tpu_custom_call.1} parent=1 // pred_check
      _
    $region15: #{tpu_custom_call.1} parent=1 // pred_check_branch
      %48 = sbr.rel (0) target = $region17
    $region16: #{tpu_custom_call.1} parent=1 // pred_region
      _
    $region17: #{tpu_custom_call.1} parent=1 // pred_fallthru
      _
    // Predicated region
    $region18: #{tpu_custom_call.1} parent=1 // pred_check
      _
    $region19: #{tpu_custom_call.1} parent=1 // pred_check_branch
      %50 = sbr.rel (0) target = $region21
    $region20: #{tpu_custom_call.1} parent=1 // pred_region
      %52 = dma.done [#allocation3], 32
    $region21: #{tpu_custom_call.1} parent=1 // pred_fallthru
      _
    // Predicated region
    $region22: #{tpu_custom_call.1} parent=1 // pred_check
      _
    $region23: #{tpu_custom_call.1} parent=1 // pred_check_branch
      %54 = sbr.rel (0) target = $region25
    $region24: #{tpu_custom_call.1} parent=1 // pred_region
      %56 = dma.done [#allocation6], 3072
    $region25: #{tpu_custom_call.1} parent=1 // pred_fallthru
      _
    // Predicated region
    $region26: #{tpu_custom_call.1} parent=1 // pred_check
      _
    $region27: #{tpu_custom_call.1} parent=1 // pred_check_branch
      %58 = sbr.rel (0) target = $region29
    $region28: #{tpu_custom_call.1} parent=1 // pred_region
      %60 = dma.done [#allocation6], 48
    $region29: #{tpu_custom_call.1} parent=1 // pred_fallthru
      _
    %v62 = vld [vmem:[#allocation2] sm:$0x3]
    %v63 = vlaneseq
    %v64 = vand.u32 %v63, 127
    %v65 = vperm.slane %v62, 0
    %v66 = vlaneseq
    %v67 = vshrl.u32 %v66, 7
    %69 = vset.pattern.permute.xlu0 %v67
    %70 = vperm.xlu0 %69, %v65
    %v71 = vpop.permute.xlu0 %70
    %v72 = vlaneseq
    %v73 = vshrl.u32 %v72, 7
    %v74 = vadd.s32 %v73, 8
    %75 = vset.pattern.permute.xlu0 %v74
    %76 = vperm.xlu0 %75, %v65
    %v77 = vpop.permute.xlu0 %76
    %v78 = vperm.slane %v62, 1
    %v79 = vlaneseq
    %v80 = vshrl.u32 %v79, 7
    %82 = vset.pattern.permute.xlu0 %v80
    %83 = vperm.xlu0 %82, %v78
    %v84 = vpop.permute.xlu0 %83
    %v85 = vlaneseq
    %v86 = vshrl.u32 %v85, 7
    %v87 = vadd.s32 %v86, 8
    %88 = vset.pattern.permute.xlu0 %v87
    %89 = vperm.xlu0 %88, %v78
    %v90 = vpop.permute.xlu0 %89
    %vm91 = vcmp.eq.s32.totalorder %v64, %v71
    %vm92 = vcmp.eq.s32.totalorder %v64, %v77
    %vm93 = vcmp.eq.s32.totalorder %v64, %v84
    %vm94 = vcmp.eq.s32.totalorder %v64, %v90
    %v95 = vsel %vm91, 1.0, 0.0
    %v96 = vsel %vm92, 1.0, 0.0
    %v97 = vsel %vm93, 1.0, 0.0
    %v98 = vsel %vm94, 1.0, 0.0
    %v99 = vpack.c.bf16 %v95, %v95
    %v100 = vpack.c.bf16 %v96, %v96
    %v101 = vpack.c.bf16 %v97, %v97
    %v102 = vpack.c.bf16 %v98, %v98
    %v103 = vld [vmem:[#allocation5] sm:$0xff]
    %v104 = vld [vmem:[#allocation5 + $0x8] sm:$0xf]
    %v105 = vld [vmem:[#allocation5 + $0xc] sm:$0xff]
    %v106 = vld [vmem:[#allocation5 + $0x14] sm:$0xf]
    %v107 = vld [vmem:[#allocation5 + $0x18] sm:$0xff]
    %v108 = vld [vmem:[#allocation5 + $0x20] sm:$0xf]
    %v109 = vld [vmem:[#allocation5 + $0x24] sm:$0xff]
    %v110 = vld [vmem:[#allocation5 + $0x2c] sm:$0xf]
    %v111 = vld [vmem:[#allocation5 + $0x30] sm:$0xff]
    %v112 = vld [vmem:[#allocation5 + $0x38] sm:$0xf]
    %v113 = vld [vmem:[#allocation5 + $0x3c] sm:$0xff]
    %v114 = vld [vmem:[#allocation5 + $0x44] sm:$0xf]
    %v115 = vld [vmem:[#allocation5 + $0x48] sm:$0xff]
    %v116 = vld [vmem:[#allocation5 + $0x50] sm:$0xf]
    %v117 = vld [vmem:[#allocation5 + $0x54] sm:$0xff]
    %v118 = vld [vmem:[#allocation5 + $0x5c] sm:$0xf]
    %v119 = vld [vmem:[#allocation5 + $0x60] sm:$0xff]
    %v120 = vld [vmem:[#allocation5 + $0x68] sm:$0xf]
    %v121 = vld [vmem:[#allocation5 + $0x6c] sm:$0xff]
    %v122 = vld [vmem:[#allocation5 + $0x74] sm:$0xf]
    %v123 = vld [vmem:[#allocation5 + $0x78] sm:$0xff]
    %v124 = vld [vmem:[#allocation5 + $0x80] sm:$0xf]
    %v125 = vld [vmem:[#allocation5 + $0x84] sm:$0xff]
    %v126 = vld [vmem:[#allocation5 + $0x8c] sm:$0xf]
    %v127 = vld [vmem:[#allocation5 + $0x90] sm:$0xff]
    %v128 = vld [vmem:[#allocation5 + $0x98] sm:$0xf]
    %v129 = vld [vmem:[#allocation5 + $0x9c] sm:$0xff]
    %v130 = vld [vmem:[#allocation5 + $0xa4] sm:$0xf]
    %v131 = vld [vmem:[#allocation5 + $0xa8] sm:$0xff]
    %v132 = vld [vmem:[#allocation5 + $0xb0] sm:$0xf]
    %v133 = vld [vmem:[#allocation5 + $0xb4] sm:$0xff]
    %v134 = vld [vmem:[#allocation5 + $0xbc] sm:$0xf]
    %v135 = vld [vmem:[#allocation7] sm:$0x7]
    %v137 = vperm.slane %v135, 0
    %v138 = vperm.slane %v135, 1
    %v139 = vperm.slane %v135, 2
    %v147 = vunpack.c.l.b16 %v99
    %v148 = vunpack.c.l.b16 %v100
    %v149 = vunpack.c.l.b16 %v101
    %v150 = vunpack.c.l.b16 %v102
    %v151 = vpack.c.b16 %v148, %v147
    %v152 = vpack.c.b16 %v150, %v149
    %v187 = vunpack.c.l.b16 %v103
    %v188 = vunpack.c.h.b16 %v103
    %v189 = vunpack.c.l.b16 %v104
    %v190 = vunpack.c.l.b16 %v105
    %v191 = vunpack.c.h.b16 %v105
    %v192 = vunpack.c.l.b16 %v106
    %v193 = vunpack.c.l.b16 %v107
    %v194 = vunpack.c.h.b16 %v107
    %v195 = vunpack.c.l.b16 %v108
    %v196 = vunpack.c.l.b16 %v109
    %v197 = vunpack.c.h.b16 %v109
    %v198 = vunpack.c.l.b16 %v110
    %v199 = vunpack.c.l.b16 %v111
    %v200 = vunpack.c.h.b16 %v111
    %v201 = vunpack.c.l.b16 %v112
    %v202 = vunpack.c.l.b16 %v113
    %v203 = vunpack.c.h.b16 %v113
    %v204 = vunpack.c.l.b16 %v114
    %v205 = vunpack.c.l.b16 %v115
    %v206 = vunpack.c.h.b16 %v115
    %v207 = vunpack.c.l.b16 %v116
    %v208 = vunpack.c.l.b16 %v117
    %v209 = vunpack.c.h.b16 %v117
    %v210 = vunpack.c.l.b16 %v118
    %v211 = vunpack.c.l.b16 %v119
    %v212 = vunpack.c.h.b16 %v119
    %v213 = vunpack.c.l.b16 %v120
    %v214 = vunpack.c.l.b16 %v121
    %v215 = vunpack.c.h.b16 %v121
    %v216 = vunpack.c.l.b16 %v122
    %v217 = vunpack.c.l.b16 %v123
    %v218 = vunpack.c.h.b16 %v123
    %v219 = vunpack.c.l.b16 %v124
    %v220 = vunpack.c.l.b16 %v125
    %v221 = vunpack.c.h.b16 %v125
    %v222 = vunpack.c.l.b16 %v126
    %v223 = vunpack.c.l.b16 %v127
    %v224 = vunpack.c.h.b16 %v127
    %v225 = vunpack.c.l.b16 %v128
    %v226 = vunpack.c.l.b16 %v129
    %v227 = vunpack.c.h.b16 %v129
    %v228 = vunpack.c.l.b16 %v130
    %v229 = vunpack.c.l.b16 %v131
    %v230 = vunpack.c.h.b16 %v131
    %v231 = vunpack.c.l.b16 %v132
    %v232 = vunpack.c.l.b16 %v133
    %v233 = vunpack.c.h.b16 %v133
    %v234 = vunpack.c.l.b16 %v134
    %v235 = vpack.c.b16 %v190, %v187
    %v236 = vpack.c.b16 %v191, %v188
    %v237 = vpack.c.b16 %v192, %v189
    %v238 = vpack.c.b16 %v196, %v193
    %v239 = vpack.c.b16 %v197, %v194
    %v240 = vpack.c.b16 %v198, %v195
    %v241 = vpack.c.b16 %v202, %v199
    %v242 = vpack.c.b16 %v203, %v200
    %v243 = vpack.c.b16 %v204, %v201
    %v244 = vpack.c.b16 %v208, %v205
    %v245 = vpack.c.b16 %v209, %v206
    %v246 = vpack.c.b16 %v210, %v207
    %v247 = vpack.c.b16 %v214, %v211
    %v248 = vpack.c.b16 %v215, %v212
    %v249 = vpack.c.b16 %v216, %v213
    %v250 = vpack.c.b16 %v220, %v217
    %v251 = vpack.c.b16 %v221, %v218
    %v252 = vpack.c.b16 %v222, %v219
    %v253 = vpack.c.b16 %v226, %v223
    %v254 = vpack.c.b16 %v227, %v224
    %v255 = vpack.c.b16 %v228, %v225
    %v256 = vpack.c.b16 %v232, %v229
    %v257 = vpack.c.b16 %v233, %v230
    %v258 = vpack.c.b16 %v234, %v231
    %283 = vmatpush.bf16.msra.mxu0 %v256
    %284 = vmatpush.bf16.msra.mxu0 %v253
    %285 = vmatpush.bf16.msra.mxu0 %v250
    %286 = vmatpush.bf16.msra.mxu0 %v247
    %287 = vmatpush.bf16.msra.mxu0 %v244
    %288 = vmatpush.bf16.msra.mxu0 %v241
    %289 = vmatpush.bf16.msra.mxu0 %v238
    %290 = vmatpush.bf16.msra.mxu0 %v235
    %291 = vmatmul.bf16.gmra.mxu0 %v151
    %v292 = vpop.f32.mrf.mxu0
    %v293 = vadd.f32 %v137, %v292
    %v294 = vpop.f32.mrf.mxu0
    %v295 = vadd.f32 %v137, %v294
    %296 = vmatmul.bf16.gmra.mxu0 %v152
    %v297 = vpop.f32.mrf.mxu0
    %v298 = vadd.f32 %v137, %v297
    %v299 = vpop.f32.mrf.mxu0
    %v300 = vadd.f32 %v137, %v299
    %301 = vdwg.mxu0
    %302 = vmatpush.bf16.msra.mxu0 %v257
    %303 = vmatpush.bf16.msra.mxu0 %v254
    %304 = vmatpush.bf16.msra.mxu0 %v251
    %305 = vmatpush.bf16.msra.mxu0 %v248
    %306 = vmatpush.bf16.msra.mxu0 %v245
    %307 = vmatpush.bf16.msra.mxu0 %v242
    %308 = vmatpush.bf16.msra.mxu0 %v239
    %309 = vmatpush.bf16.msra.mxu0 %v236
    %310 = vmatmul.bf16.gmra.mxu0 %v151
    %v311 = vpop.f32.mrf.mxu0
    %v312 = vadd.f32 %v138, %v311
    %v313 = vpop.f32.mrf.mxu0
    %v314 = vadd.f32 %v138, %v313
    %315 = vmatmul.bf16.gmra.mxu0 %v152
    %v316 = vpop.f32.mrf.mxu0
    %v317 = vadd.f32 %v138, %v316
    %v318 = vpop.f32.mrf.mxu0
    %v319 = vadd.f32 %v138, %v318
    %320 = vdwg.mxu0
    %321 = vmatpush.bf16.msra.mxu0 %v258
    %322 = vmatpush.bf16.msra.mxu0 %v255
    %323 = vmatpush.bf16.msra.mxu0 %v252
    %324 = vmatpush.bf16.msra.mxu0 %v249
    %325 = vmatpush.bf16.msra.mxu0 %v246
    %326 = vmatpush.bf16.msra.mxu0 %v243
    %327 = vmatpush.bf16.msra.mxu0 %v240
    %328 = vmatpush.bf16.msra.mxu0 %v237
    %329 = vmatmul.bf16.gmra.mxu0 %v151
    %v330 = vpop.f32.mrf.mxu0
    %v331 = vadd.f32 %v139, %v330
    %v332 = vpop.f32.mrf.mxu0
    %v333 = vadd.f32 %v139, %v332
    %334 = vmatmul.bf16.gmra.mxu0 %v152
    %v335 = vpop.f32.mrf.mxu0
    %v336 = vadd.f32 %v139, %v335
    %v337 = vpop.f32.mrf.mxu0
    %v338 = vadd.f32 %v139, %v337
    %339 = vdwg.mxu0
    %v340 = vpack.c.bf16 %v293, %v293
    %v341 = vpack.c.bf16 %v295, %v295
    %v342 = vpack.c.bf16 %v298, %v298
    %v343 = vpack.c.bf16 %v300, %v300
    %v344 = vpack.c.bf16 %v312, %v312
    %v345 = vpack.c.bf16 %v314, %v314
    %v346 = vpack.c.bf16 %v317, %v317
    %v347 = vpack.c.bf16 %v319, %v319
    %v350 = vunpack.c.l.b16 %v340
    %v351 = vunpack.c.l.b16 %v341
    %v352 = vpack.c.b16 %v351, %v350
    %v356 = vunpack.c.l.b16 %v344
    %v357 = vunpack.c.l.b16 %v345
    %v358 = vpack.c.b16 %v357, %v356
    %360 = vmatpush.bf16.xpose.msra.mxu0 0
    %361 = vmatpush.bf16.xpose.msra.mxu0 0
    %362 = vmatpush.bf16.xpose.msra.mxu0 0
    %363 = vmatpush.bf16.xpose.msra.mxu0 0
    %364 = vmatpush.bf16.xpose.msra.mxu0 0
    %365 = vmatpush.bf16.xpose.msra.mxu0 0
    %366 = vmatpush.bf16.xpose.msra.mxu0 0
    %367 = vmatpush.bf16.xpose.msra.mxu0 %v358
    %368 = vmatmul.bf16.gmra.mxu0 %v352
    %v369 = vpop.f32.mrf.mxu0
    %v370 = vadd.f32 0.0, %v369
    %v371 = vpop.f32.mrf.mxu0
    %v372 = vadd.f32 0.0, %v371
    %373 = vdwg.mxu0
    %v376 = vunpack.c.l.b16 %v342
    %v377 = vunpack.c.l.b16 %v343
    %v378 = vpack.c.b16 %v377, %v376
    %v382 = vunpack.c.l.b16 %v346
    %v383 = vunpack.c.l.b16 %v347
    %v384 = vpack.c.b16 %v383, %v382
    %386 = vmatpush.bf16.xpose.msra.mxu0 0
    %387 = vmatpush.bf16.xpose.msra.mxu0 0
    %388 = vmatpush.bf16.xpose.msra.mxu0 0
    %389 = vmatpush.bf16.xpose.msra.mxu0 0
    %390 = vmatpush.bf16.xpose.msra.mxu0 0
    %391 = vmatpush.bf16.xpose.msra.mxu0 0
    %392 = vmatpush.bf16.xpose.msra.mxu0 0
    %393 = vmatpush.bf16.xpose.msra.mxu0 %v384
    %394 = vmatmul.bf16.gmra.mxu0 %v378
    %v395 = vpop.f32.mrf.mxu0
    %v396 = vadd.f32 0.0, %v395
    %v397 = vpop.f32.mrf.mxu0
    %v398 = vadd.f32 0.0, %v397
    %399 = vdwg.mxu0
    %vm400 = vcmask 130048
    %v401 = vsel %vm400, %v370, -inf
    %402 = vmax.xlane.f32.xlu0 %v401
    %v403 = vpop.xlane.xlu0 %402
    %v404 = vsel %vm400, %v372, -inf
    %405 = vmax.xlane.f32.xlu0 %v404
    %v406 = vpop.xlane.xlu0 %405
    %v407 = vsel %vm400, %v396, -inf
    %408 = vmax.xlane.f32.xlu0 %v407
    %v409 = vpop.xlane.xlu0 %408
    %v410 = vsel %vm400, %v398, -inf
    %411 = vmax.xlane.f32.xlu0 %v410
    %v412 = vpop.xlane.xlu0 %411
    %v413 = vsub.f32 %v370, %v403
    %v414 = vsub.f32 %v372, %v406
    %v415 = vsub.f32 %v396, %v409
    %v416 = vsub.f32 %v398, %v412
    %v417 = vmul.f32 %v413, 1.442695
    %v418 = vpow.pop %v417
    %v419 = vmul.f32 %v414, 1.442695
    %v420 = vpow.pop %v419
    %v421 = vmul.f32 %v415, 1.442695
    %v422 = vpow.pop %v421
    %v423 = vmul.f32 %v416, 1.442695
    %v424 = vpow.pop %v423
    %v425 = vsel %vm400, %v418, 0.0
    %426 = vadd.xlane.f32.xlu0 %v425
    %v427 = vpop.xlane.xlu0 %426
    %v428 = vsel %vm400, %v420, 0.0
    %429 = vadd.xlane.f32.xlu0 %v428
    %v430 = vpop.xlane.xlu0 %429
    %v431 = vsel %vm400, %v422, 0.0
    %432 = vadd.xlane.f32.xlu0 %v431
    %v433 = vpop.xlane.xlu0 %432
    %v434 = vsel %vm400, %v424, 0.0
    %435 = vadd.xlane.f32.xlu0 %v434
    %v436 = vpop.xlane.xlu0 %435
    %v437 = vrcp.pop %v427
    %v438 = vrcp.pop %v430
    %v439 = vrcp.pop %v433
    %v440 = vrcp.pop %v436
    %v441 = vmul.f32 %v418, %v437
    %v442 = vmul.f32 %v420, %v438
    %v443 = vmul.f32 %v422, %v439
    %v444 = vmul.f32 %v424, %v440
    %v445 = vsel %vm400, %v441, 0.0
    %v446 = vsel %vm400, %v442, 0.0
    %v447 = vadd.f32 %v445, %v446
    %v448 = vrot.slane %v447, 4
    %v449 = vadd.f32 %v447, %v448
    %v450 = vrot.slane %v449, 2
    %v451 = vadd.f32 %v449, %v450
    %v452 = vrot.slane %v451, 1
    %v453 = vadd.f32 %v451, %v452
    %v454 = vsel %vm400, %v443, 0.0
    %v455 = vsel %vm400, %v444, 0.0
    %v456 = vadd.f32 %v454, %v455
    %v457 = vrot.slane %v456, 4
    %v458 = vadd.f32 %v456, %v457
    %v459 = vrot.slane %v458, 2
    %v460 = vadd.f32 %v458, %v459
    %v461 = vrot.slane %v460, 1
    %v462 = vadd.f32 %v460, %v461
    %v463 = vmul.f32 %v453, 0.0625
    %v464 = vmul.f32 %v462, 0.0625
    %v465 = vlaneseq
    %v466 = vshrl.u32 %v465, 7
    %468 = vset.pattern.permute.xlu0 %v466
    %469 = vperm.xlu0 %468, %v463
    %v470 = vpop.permute.xlu0 %469
    %v471 = vlaneseq
    %v472 = vshrl.u32 %v471, 7
    %v473 = vadd.s32 %v472, 8
    %474 = vset.pattern.permute.xlu0 %v473
    %475 = vperm.xlu0 %474, %v463
    %v476 = vpop.permute.xlu0 %475
    %v477 = vlaneseq
    %v478 = vshrl.u32 %v477, 7
    %480 = vset.pattern.permute.xlu0 %v478
    %481 = vperm.xlu0 %480, %v464
    %v482 = vpop.permute.xlu0 %481
    %v483 = vlaneseq
    %v484 = vshrl.u32 %v483, 7
    %v485 = vadd.s32 %v484, 8
    %486 = vset.pattern.permute.xlu0 %v485
    %487 = vperm.xlu0 %486, %v464
    %v488 = vpop.permute.xlu0 %487
    %v489 = vmul.f32 %v470, %v331
    %v490 = vmul.f32 %v476, %v333
    %v491 = vmul.f32 %v482, %v336
    %v492 = vmul.f32 %v488, %v338
    %v493 = vadd.f32 %v489, %v490
    %v494 = vrot.slane %v493, 4
    %v495 = vadd.f32 %v493, %v494
    %v496 = vrot.slane %v495, 2
    %v497 = vadd.f32 %v495, %v496
    %v498 = vrot.slane %v497, 1
    %v499 = vadd.f32 %v497, %v498
    %v500 = vadd.f32 %v491, %v492
    %v501 = vrot.slane %v500, 4
    %v502 = vadd.f32 %v500, %v501
    %v503 = vrot.slane %v502, 2
    %v504 = vadd.f32 %v502, %v503
    %v505 = vrot.slane %v504, 1
    %v506 = vadd.f32 %v504, %v505
    %v507 = vld [vmem:[%s3] sm:$0x1]
    %v509 = vperm.slane %v507, 0
    %v511 = vadd.f32 %v499, %v509
    %v512 = vadd.f32 %v506, %v509
    %v515 = vrot.slane %v512, 7
    %vm516 = vcmask 1041409
    %v517 = vsel %vm516, %v515, %v511
    %519 = vst [vmem:[#allocation8] sm:$0x3] %v517
    // Predicated region
    $region30: #{tpu_custom_call.1} parent=1 // pred_check
      _
    $region31: #{tpu_custom_call.1} parent=1 // pred_check_branch
      %521 = sbr.rel (0) target = $region33
    $region32: #{tpu_custom_call.1} parent=1 // pred_region
      %523 = vsyncadd [#allocation4], 0
      %s525 = sshll.u32 [#allocation8], 4
      %s526 = int_to_ptr.vmem [resolvable:$true] %s525
      %s527 = sshll.u32 %s4, 4
      %s528 = int_to_ptr.hbm [resolvable:$true] %s527
      %530 = dma.vmem_to_hbm [thread:$0]  %s526, 32, %s528, [#allocation4]
    $region33: #{tpu_custom_call.1} parent=1 // pred_fallthru
      _
    // Predicated region
    $region34: #{tpu_custom_call.1} parent=1 // pred_check
      _
    $region35: #{tpu_custom_call.1} parent=1 // pred_check_branch
      %532 = sbr.rel (0) target = $region37
    $region36: #{tpu_custom_call.1} parent=1 // pred_region
      %534 = dma.done [#allocation4], 32
    $region37: #{tpu_custom_call.1} parent=1 // pred_fallthru
      _
    %535 = vsyncpa [#allocation3], 1
    %536 = vsyncpa [#allocation6], 1
    %537 = vsyncpa [#allocation4], 1

</llo_original>
